<compile_context>
chip_gen: v7x
topology: tpu7x:2x2x1
jax: 0.10.0
libtpu: 0.0.40
codegen_flags: <defaults>
</compile_context>

<pallas_src>
import jax
import jax.numpy as jnp
from jax.experimental import pallas as pl
from jax.experimental.pallas import tpu as pltpu


def _round_up(x, m):
    return (x + m - 1) // m * m


def dqn_forward(states, w1, b1, w2, b2, *, tb=512):
    """Q = relu(states @ w1 + b1) @ w2 + b2 via one Pallas kernel.

    states: [B, S] f32;  w1: [S, H];  b1: [1, H];  w2: [H, A];  b2: [1, A]
    """
    B, S = states.shape
    H = w1.shape[1]
    A = w2.shape[1]

    # Lane-pad the hidden and action dims to 128; sublane-align sections to 8.
    Hp = _round_up(H, 128)
    Ap = _round_up(A, 128)
    P = max(Hp, Ap)            # common lane width for the packed param slab
    Sp = _round_up(S, 8)

    # Packed parameter slab layout (rows), every section starts on an 8-row
    # boundary so in-kernel static slices never straddle (8,128) tiles:
    #   [r_w1 : r_w1+S)   -> w1   (cols :H)
    #   [r_b1]            -> b1   (cols :H)
    #   [r_w2 : r_w2+H)   -> w2   (cols :A)
    #   [r_b2]            -> b2   (cols :A)
    r_w1 = 0
    r_b1 = Sp
    r_w2 = Sp + 8
    r_b2 = Sp + 8 + Hp
    n_rows = Sp + 8 + Hp + 8

    params = jnp.zeros((n_rows, P), jnp.float32)
    params = params.at[r_w1:r_w1 + S, :H].set(w1.astype(jnp.float32))
    params = params.at[r_b1, :H].set(b1.reshape(-1).astype(jnp.float32))
    params = params.at[r_w2:r_w2 + H, :A].set(w2.astype(jnp.float32))
    params = params.at[r_b2, :A].set(b2.reshape(-1).astype(jnp.float32))

    # Batch tiling: biggest tile up to `tb`, multiple of 8; pad B up to it.
    TB = min(tb, _round_up(B, 8))
    Bp = _round_up(B, TB)
    x = states.astype(jnp.float32)
    if Bp != B:
        x = jnp.pad(x, ((0, Bp - B), (0, 0)))

    def kernel(x_ref, p_ref, out_ref):
        w1v = p_ref[r_w1:r_w1 + S, :Hp]        # [S,  Hp]
        b1v = p_ref[r_b1:r_b1 + 1, :Hp]        # [1,  Hp]
        w2v = p_ref[r_w2:r_w2 + Hp, :Ap]       # [Hp, Ap] (zero-padded rows)
        b2v = p_ref[r_b2:r_b2 + 1, :Ap]        # [1,  Ap]
        h = jnp.dot(x_ref[...], w1v, preferred_element_type=jnp.float32) + b1v
        h = jnp.maximum(h, 0.0)                # ReLU (activation_type='relu')
        out_ref[...] = (
            jnp.dot(h, w2v, preferred_element_type=jnp.float32) + b2v
        )

    q = pl.pallas_call(
        kernel,
        out_shape=jax.ShapeDtypeStruct((Bp, Ap), jnp.float32),
        grid_spec=pl.GridSpec(
            grid=(Bp // TB,),
            in_specs=[
                # activation tile: pipelined over the batch axis
                pl.BlockSpec((TB, S), lambda i: (i, 0)),
                # packed params: same block every step -> stays VMEM-resident
                pl.BlockSpec((n_rows, P), lambda i: (0, 0)),
            ],
            out_specs=pl.BlockSpec((TB, Ap), lambda i: (i, 0)),
        ),
        compiler_params=pltpu.CompilerParams(
            # batch axis is independent -> megacore-shardable on v7x
            dimension_semantics=("parallel",),
        ),
    )(x, params)

    return q[:B, :A]


def init_linear_params(key, fan_in, fan_out):
    # Mimic PyTorch nn.Linear default init: U(-1/sqrt(fan_in), 1/sqrt(fan_in))
    kw, kb = jax.random.split(key)
    bound = 1.0 / jnp.sqrt(jnp.float32(fan_in))
    # stored as [in, out] (transposed relative to torch's [out, in])
    w = jax.random.uniform(kw, (fan_in, fan_out), jnp.float32, -bound, bound)
    b = jax.random.uniform(kb, (1, fan_out), jnp.float32, -bound, bound)
    return w, b


def _reference(states, w1, b1, w2, b2):
    return jnp.maximum(states @ w1 + b1, 0.0) @ w2 + b2


if __name__ == "__main__":
    # Small shapes consistent with the module: state_number=8, hidden=32, action=4
    B, S, H, A = 2, 8, 32, 4

    key = jax.random.PRNGKey(0)
    k_x, k_fc1, k_fc2, k_big = jax.random.split(key, 4)

    states = jax.random.normal(k_x, (B, S), jnp.float32)
    w1, b1 = init_linear_params(k_fc1, S, H)
    w2, b2 = init_linear_params(k_fc2, H, A)

    # Small (B=2) check — matches the original __main__.
    q_values = jax.block_until_ready(dqn_forward(states, w1, b1, w2, b2))
    ref = _reference(states, w1, b1, w2, b2)
    assert q_values.shape == (B, A)
    assert jnp.allclose(q_values, ref, atol=1e-5, rtol=1e-5)

    # Larger-batch check to exercise the tiled / multi-step ("parallel") grid.
    Bbig = 1024
    states_big = jax.random.normal(k_big, (Bbig, S), jnp.float32)
    q_big = jax.block_until_ready(dqn_forward(states_big, w1, b1, w2, b2))
    ref_big = _reference(states_big, w1, b1, w2, b2)
    assert q_big.shape == (Bbig, A)
    assert jnp.allclose(q_big, ref_big, atol=1e-5, rtol=1e-5)

    print("KERNEL_OK")
</pallas_src>

<mosaic_0001>
module attributes {stable_mosaic.version = 11 : i64} {
  func.func @kernel(%arg0: i32, %arg1: memref<8x8xf32, #tpu.memory_space<vmem>>, %arg2: memref<152x128xf32, #tpu.memory_space<vmem>>, %arg3: memref<8x128xf32, #tpu.memory_space<vmem>>) attributes {dimension_semantics = [#tpu.dimension_semantics<parallel>], iteration_bounds = array<i64: 1>, scalar_prefetch = 0 : i64, scratch_operands = 0 : i64, tpu.core_type = #tpu.core_type<tc>, window_params = [{transform_indices = @transform_0, window_bounds = array<i64: 8, 8>}, {pipeline_mode = #tpu.pipeline_mode<synchronous>, transform_indices = @transform_1, window_bounds = array<i64: 152, 128>}, {transform_indices = @transform_2, window_bounds = array<i64: 8, 128>}]} {
    %c0 = arith.constant 0 : index
    %c0_0 = arith.constant 0 : index
    %0 = vector.load %arg2[%c0, %c0_0] : memref<152x128xf32, #tpu.memory_space<vmem>>, vector<8x128xf32>
    %c8 = arith.constant 8 : index
    %c0_1 = arith.constant 0 : index
    %1 = vector.load %arg2[%c8, %c0_1] : memref<152x128xf32, #tpu.memory_space<vmem>>, vector<1x128xf32>
    %c16 = arith.constant 16 : index
    %c0_2 = arith.constant 0 : index
    %2 = vector.load %arg2[%c16, %c0_2] : memref<152x128xf32, #tpu.memory_space<vmem>>, vector<128x128xf32>
    %c144 = arith.constant 144 : index
    %c0_3 = arith.constant 0 : index
    %3 = vector.load %arg2[%c144, %c0_3] : memref<152x128xf32, #tpu.memory_space<vmem>>, vector<1x128xf32>
    %c0_4 = arith.constant 0 : index
    %c0_5 = arith.constant 0 : index
    %4 = vector.load %arg1[%c0_4, %c0_5] : memref<8x8xf32, #tpu.memory_space<vmem>>, vector<8x8xf32>
    %cst = arith.constant dense<0.000000e+00> : vector<8x128xf32>
    %5 = tpu.matmul %4, %0, %cst {dimension_numbers = #tpu.dot_dimension_numbers<[1], [0], [0], [1], [0, 0, 1, 1], [], []>} : vector<8x8xf32>, vector<8x128xf32>, vector<8x128xf32> -> vector<8x128xf32>
    %6 = vector.broadcast %1 : vector<1x128xf32> to vector<8x128xf32>
    %7 = arith.addf %5, %6 : vector<8x128xf32>
    %cst_6 = arith.constant 0.000000e+00 : f32
    %8 = vector.broadcast %cst_6 : f32 to vector<8x128xf32>
    %9 = arith.maximumf %7, %8 : vector<8x128xf32>
    %cst_7 = arith.constant dense<0.000000e+00> : vector<8x128xf32>
    %10 = tpu.matmul %9, %2, %cst_7 {dimension_numbers = #tpu.dot_dimension_numbers<[1], [0], [0], [1], [0, 0, 1, 1], [], []>} : vector<8x128xf32>, vector<128x128xf32>, vector<8x128xf32> -> vector<8x128xf32>
    %11 = vector.broadcast %3 : vector<1x128xf32> to vector<8x128xf32>
    %12 = arith.addf %10, %11 : vector<8x128xf32>
    %c0_8 = arith.constant 0 : index
    %c0_9 = arith.constant 0 : index
    %13 = vector.load %arg3[%c0_8, %c0_9] : memref<8x128xf32, #tpu.memory_space<vmem>>, vector<8x128xf32>
    tpu.vector_store %arg3[%c0_8, %c0_9], %12 {strides = array<i32>} : memref<8x128xf32, #tpu.memory_space<vmem>>, vector<8x128xf32>,
    return
  }
  func.func @transform_0(%arg0: i32) -> (i32, i32) {
    %c0_i32 = arith.constant 0 : i32
    %c0_i32_0 = arith.constant 0 : i32
    return %arg0, %c0_i32 : i32, i32
  }
  func.func @transform_1(%arg0: i32) -> (i32, i32) {
    %c0_i32 = arith.constant 0 : i32
    %c0_i32_0 = arith.constant 0 : i32
    %c0_i32_1 = arith.constant 0 : i32
    return %c0_i32, %c0_i32_0 : i32, i32
  }
  func.func @transform_2(%arg0: i32) -> (i32, i32) {
    %c0_i32 = arith.constant 0 : i32
    %c0_i32_0 = arith.constant 0 : i32
    return %arg0, %c0_i32 : i32, i32
  }
}

</mosaic_0001>

<llo_original>
// kernel: tpu_custom_call.1
$region0: #{tpu_custom_call.1}
  #allocation0 [shape = 'u32[]', space=smem, size = 0x4, offset = 0x4, fixed_abs, tag = 'smem constant byte address 0x4 - core index']
  #allocation1 [shape = 'u32[144,128]{1,0:T(1,128)}', space=vmem, size = 0x12000, scoped, tag = 'internal scratch']
  %s0 = inlined_call_operand.hbm [shape: f32[8,8], index: 0, kind: input, shape index: {}]
  %s1 = inlined_call_operand.hbm [shape: f32[152,128], index: 1, kind: input, shape index: {}]
  %s2 = inlined_call_operand.hbm [shape: f32[8,128], index: 2, kind: output, shape index: {}]
  %s3 = sld [smem:[#allocation0]]
  $region26: #{tpu_custom_call.1} parent=0
    _
  %s5 = ssub.s32 1, %s3
  %s6 = scalar_select 0, %s5, %s3
  $region1: #{tpu_custom_call.1} parent=0
    #allocation2 [shape = 'u8[4096]{0}', space=vmem, size = 0x1000, scoped, tag = 'input window, operand 0, single buffered']
    #allocation3 [shape = 's32[1]{0}', space=sflag, size = 0x4, scoped, tag = 'scoped memory for tpu_custom_call.1']
    #allocation4 [shape = 's32[1]{0}', space=sflag, size = 0x4, scoped, tag = 'scoped memory for tpu_custom_call.1']
    #allocation5 [shape = 'u8[77824]{0}', space=vmem, size = 0x13000, scoped, tag = 'input window, operand 1, single buffered']
    #allocation6 [shape = 's32[1]{0}', space=sflag, size = 0x4, scoped, tag = 'scoped memory for tpu_custom_call.1']
    #allocation7 [shape = 'u8[4096]{0}', space=vmem, size = 0x1000, scoped, tag = 'output window, operand 0, single buffered']
    %7 = vsyncpa [#allocation3], 0
    %8 = vsyncpa [#allocation6], 0
    %9 = vsyncpa [#allocation4], 0
    // Predicated region
    $region2: #{tpu_custom_call.1} parent=1 // pred_check
      _
    $region3: #{tpu_custom_call.1} parent=1 // pred_check_branch
      %11 = sbr.rel (0) target = $region5
    $region4: #{tpu_custom_call.1} parent=1 // pred_region
      %s13 = ssub.s32 128, 128
      %14 = vsyncadd [#allocation3], %s13
      %s16 = sshll.u32 [#allocation2], 4
      %s17 = int_to_ptr.vmem [resolvable:$true] %s16
      %19 = dma.hbm_to_vmem [thread:$0]  %s0, 128, %s17, [#allocation3]
    $region5: #{tpu_custom_call.1} parent=1 // pred_fallthru
      _
    // Predicated region
    $region6: #{tpu_custom_call.1} parent=1 // pred_check
      _
    $region7: #{tpu_custom_call.1} parent=1 // pred_check_branch
      %21 = sbr.rel (0) target = $region9
    $region8: #{tpu_custom_call.1} parent=1 // pred_region
      %s23 = ssub.s32 2432, 2432
      %24 = vsyncadd [#allocation6], %s23
      %s25 = sshll.u32 [#allocation5], 4
      %s26 = int_to_ptr.vmem [resolvable:$true] %s25
      %31 = dma.hbm_to_vmem [thread:$0]  %s1, 2432, %s26, [#allocation6], 128, 128, 8
    $region9: #{tpu_custom_call.1} parent=1 // pred_fallthru
      _
    // Predicated region
    $region10: #{tpu_custom_call.1} parent=1 // pred_check
      _
    $region11: #{tpu_custom_call.1} parent=1 // pred_check_branch
      %33 = sbr.rel (0) target = $region13
    $region12: #{tpu_custom_call.1} parent=1 // pred_region
      %34 = dma.done [#allocation3], 128
    $region13: #{tpu_custom_call.1} parent=1 // pred_fallthru
      _
    // Predicated region
    $region14: #{tpu_custom_call.1} parent=1 // pred_check
      _
    $region15: #{tpu_custom_call.1} parent=1 // pred_check_branch
      %36 = sbr.rel (0) target = $region17
    $region16: #{tpu_custom_call.1} parent=1 // pred_region
      %37 = dma.done [#allocation6], 2432
    $region17: #{tpu_custom_call.1} parent=1 // pred_fallthru
      _
    %v38 = vld [vmem:[#allocation5] sm:$0xff]
    %v39 = vld [vmem:[#allocation5 + $0x8] sm:$0x1]
    %v40 = vld [vmem:[#allocation5 + $0x10] sm:$0xff]
    %v41 = vld [vmem:[#allocation5 + $0x18] sm:$0xff]
    %v42 = vld [vmem:[#allocation5 + $0x20] sm:$0xff]
    %v43 = vld [vmem:[#allocation5 + $0x28] sm:$0xff]
    %v44 = vld [vmem:[#allocation5 + $0x30] sm:$0xff]
    %v45 = vld [vmem:[#allocation5 + $0x38] sm:$0xff]
    %v46 = vld [vmem:[#allocation5 + $0x40] sm:$0xff]
    %v47 = vld [vmem:[#allocation5 + $0x48] sm:$0xff]
    %v48 = vld [vmem:[#allocation5 + $0x50] sm:$0xff]
    %v49 = vld [vmem:[#allocation5 + $0x58] sm:$0xff]
    %v50 = vld [vmem:[#allocation5 + $0x60] sm:$0xff]
    %v51 = vld [vmem:[#allocation5 + $0x68] sm:$0xff]
    %v52 = vld [vmem:[#allocation5 + $0x70] sm:$0xff]
    %v53 = vld [vmem:[#allocation5 + $0x78] sm:$0xff]
    %v54 = vld [vmem:[#allocation5 + $0x80] sm:$0xff]
    %v55 = vld [vmem:[#allocation5 + $0x88] sm:$0xff]
    %v56 = vld [vmem:[#allocation5 + $0x90] sm:$0x1]
    %v57 = vld [vmem:[#allocation2] sm:$0xff]
    %v58 = vlaneseq
    %v59 = vshrl.u32 %v58, 7
    %v60 = vsub.s32 0, %v59
    %v61 = vrot.slane %v39, %v60
    %vm62 = vcmask 64512
    %v64 = vsel %vm62, %v57, 0
    %66 = vmatprep.subr.mxu0 0.0
    %67 = vmatpush1.msra.mxu0 %v38
    %68 = vmatprep.subr.mxu0 0.0
    %69 = vmatpush1.msra.mxu0 0.0
    %70 = vmatprep.subr.mxu0 0.0
    %71 = vmatpush1.msra.mxu0 0.0
    %72 = vmatprep.subr.mxu0 0.0
    %73 = vmatpush1.msra.mxu0 0.0
    %74 = vmatprep.subr.mxu0 0.0
    %75 = vmatpush1.msra.mxu0 0.0
    %76 = vmatprep.subr.mxu0 0.0
    %77 = vmatpush1.msra.mxu0 0.0
    %78 = vmatprep.subr.mxu0 0.0
    %79 = vmatpush1.msra.mxu0 0.0
    %80 = vmatprep.subr.mxu0 0.0
    %81 = vmatpush1.msra.mxu0 0.0
    %82 = vmatprep.subr.mxu0 0.0
    %83 = vmatpush1.msra.mxu0 0.0
    %84 = vmatprep.subr.mxu0 0.0
    %85 = vmatpush1.msra.mxu0 0.0
    %86 = vmatprep.subr.mxu0 0.0
    %87 = vmatpush1.msra.mxu0 0.0
    %88 = vmatprep.subr.mxu0 0.0
    %89 = vmatpush1.msra.mxu0 0.0
    %90 = vmatprep.subr.mxu0 0.0
    %91 = vmatpush1.msra.mxu0 0.0
    %92 = vmatprep.subr.mxu0 0.0
    %93 = vmatpush1.msra.mxu0 0.0
    %94 = vmatprep.subr.mxu0 0.0
    %95 = vmatpush1.msra.mxu0 0.0
    %96 = vmatprep.subr.mxu0 0.0
    %97 = vmatpush1.msra.mxu0 0.0
    %98 = vmatprep.subr.mxu0 0.0
    %99 = vmatpush1.msra.mxu0 0.0
    %100 = vmatprep.subr.mxu0 0.0
    %101 = vmatpush1.msra.mxu0 0.0
    %102 = vmatprep.subr.mxu0 0.0
    %103 = vmatpush1.msra.mxu0 0.0
    %104 = vmatprep.subr.mxu0 0.0
    %105 = vmatpush1.msra.mxu0 0.0
    %106 = vmatprep.subr.mxu0 0.0
    %107 = vmatpush1.msra.mxu0 0.0
    %108 = vmatprep.subr.mxu0 0.0
    %109 = vmatpush1.msra.mxu0 0.0
    %110 = vmatprep.subr.mxu0 0.0
    %111 = vmatpush1.msra.mxu0 0.0
    %112 = vmatprep.subr.mxu0 0.0
    %113 = vmatpush1.msra.mxu0 0.0
    %114 = vmatprep.subr.mxu0 0.0
    %115 = vmatpush1.msra.mxu0 0.0
    %116 = vmatprep.subr.mxu0 0.0
    %117 = vmatpush1.msra.mxu0 0.0
    %118 = vmatprep.subr.mxu0 0.0
    %119 = vmatpush1.msra.mxu0 0.0
    %120 = vmatprep.subr.mxu0 0.0
    %121 = vmatpush1.msra.mxu0 0.0
    %122 = vmatprep.subr.mxu0 0.0
    %123 = vmatpush1.msra.mxu0 0.0
    %124 = vmatprep.subr.mxu0 0.0
    %125 = vmatpush1.msra.mxu0 0.0
    %126 = vmatprep.subr.mxu0 0.0
    %127 = vmatpush1.msra.mxu0 0.0
    %128 = vmatprep.subr.mxu0 0.0
    %129 = vmatpush1.msra.mxu0 0.0
    %130 = vmatprep.mubr.f32.mxu0 0.0
    %131 = vmatmul.mubr.f32.gmra.mrb[0].mxu0 %v64
    %v132 = vpop.f32.mrb[0].mxu0
    %v133 = vadd.f32 %v61, %v132
    %v134 = vpop.f32.mrb[0].mxu0
    %135 = vdwg.mxu0
    %v136 = vmax.f32 %v133, 0.0
    %v137 = vlaneseq
    %v138 = vshrl.u32 %v137, 7
    %v139 = vsub.s32 0, %v138
    %v140 = vrot.slane %v56, %v139
    %141 = vmatprep.subr.mxu0 0.0
    %142 = vmatpush1.msra.mxu0 %v40
    %143 = vmatprep.subr.mxu0 0.0
    %144 = vmatpush1.msra.mxu0 %v41
    %145 = vmatprep.subr.mxu0 0.0
    %146 = vmatpush1.msra.mxu0 %v42
    %147 = vmatprep.subr.mxu0 0.0
    %148 = vmatpush1.msra.mxu0 %v43
    %149 = vmatprep.subr.mxu0 0.0
    %150 = vmatpush1.msra.mxu0 %v44
    %151 = vmatprep.subr.mxu0 0.0
    %152 = vmatpush1.msra.mxu0 %v45
    %153 = vmatprep.subr.mxu0 0.0
    %154 = vmatpush1.msra.mxu0 %v46
    %155 = vmatprep.subr.mxu0 0.0
    %156 = vmatpush1.msra.mxu0 %v47
    %157 = vmatprep.subr.mxu0 0.0
    %158 = vmatpush1.msra.mxu0 %v48
    %159 = vmatprep.subr.mxu0 0.0
    %160 = vmatpush1.msra.mxu0 %v49
    %161 = vmatprep.subr.mxu0 0.0
    %162 = vmatpush1.msra.mxu0 %v50
    %163 = vmatprep.subr.mxu0 0.0
    %164 = vmatpush1.msra.mxu0 %v51
    %165 = vmatprep.subr.mxu0 0.0
    %166 = vmatpush1.msra.mxu0 %v52
    %167 = vmatprep.subr.mxu0 0.0
    %168 = vmatpush1.msra.mxu0 %v53
    %169 = vmatprep.subr.mxu0 0.0
    %170 = vmatpush1.msra.mxu0 %v54
    %171 = vmatprep.subr.mxu0 0.0
    %172 = vmatpush1.msra.mxu0 %v55
    %173 = vmatprep.subr.mxu0 0.0
    %174 = vmatpush1.msra.mxu0 0.0
    %175 = vmatprep.subr.mxu0 0.0
    %176 = vmatpush1.msra.mxu0 0.0
    %177 = vmatprep.subr.mxu0 0.0
    %178 = vmatpush1.msra.mxu0 0.0
    %179 = vmatprep.subr.mxu0 0.0
    %180 = vmatpush1.msra.mxu0 0.0
    %181 = vmatprep.subr.mxu0 0.0
    %182 = vmatpush1.msra.mxu0 0.0
    %183 = vmatprep.subr.mxu0 0.0
    %184 = vmatpush1.msra.mxu0 0.0
    %185 = vmatprep.subr.mxu0 0.0
    %186 = vmatpush1.msra.mxu0 0.0
    %187 = vmatprep.subr.mxu0 0.0
    %188 = vmatpush1.msra.mxu0 0.0
    %189 = vmatprep.subr.mxu0 0.0
    %190 = vmatpush1.msra.mxu0 0.0
    %191 = vmatprep.subr.mxu0 0.0
    %192 = vmatpush1.msra.mxu0 0.0
    %193 = vmatprep.subr.mxu0 0.0
    %194 = vmatpush1.msra.mxu0 0.0
    %195 = vmatprep.subr.mxu0 0.0
    %196 = vmatpush1.msra.mxu0 0.0
    %197 = vmatprep.subr.mxu0 0.0
    %198 = vmatpush1.msra.mxu0 0.0
    %199 = vmatprep.subr.mxu0 0.0
    %200 = vmatpush1.msra.mxu0 0.0
    %201 = vmatprep.subr.mxu0 0.0
    %202 = vmatpush1.msra.mxu0 0.0
    %203 = vmatprep.subr.mxu0 0.0
    %204 = vmatpush1.msra.mxu0 0.0
    %205 = vmatprep.mubr.f32.mxu0 0.0
    %206 = vmatmul.mubr.f32.gmra.mrb[0].mxu0 %v136
    %v207 = vpop.f32.mrb[0].mxu0
    %v208 = vadd.f32 %v140, %v207
    %v209 = vpop.f32.mrb[0].mxu0
    %210 = vdwg.mxu0
    %211 = vst [vmem:[#allocation7] sm:$0xff] %v208
    // Predicated region
    $region18: #{tpu_custom_call.1} parent=1 // pred_check
      _
    $region19: #{tpu_custom_call.1} parent=1 // pred_check_branch
      %213 = sbr.rel (0) target = $region21
    $region20: #{tpu_custom_call.1} parent=1 // pred_region
      %s215 = ssub.s32 128, 128
      %216 = vsyncadd [#allocation4], %s215
      %s218 = sshll.u32 [#allocation7], 4
      %s219 = int_to_ptr.vmem [resolvable:$true] %s218
      %221 = dma.vmem_to_hbm [thread:$0]  %s219, 128, %s2, [#allocation4]
    $region21: #{tpu_custom_call.1} parent=1 // pred_fallthru
      _
    // Predicated region
    $region22: #{tpu_custom_call.1} parent=1 // pred_check
      _
    $region23: #{tpu_custom_call.1} parent=1 // pred_check_branch
      %223 = sbr.rel (0) target = $region25
    $region24: #{tpu_custom_call.1} parent=1 // pred_region
      %224 = dma.done [#allocation4], 128
    $region25: #{tpu_custom_call.1} parent=1 // pred_fallthru
      _
    %225 = vsyncpa [#allocation3], 1
    %226 = vsyncpa [#allocation6], 1
    %227 = vsyncpa [#allocation4], 1

</llo_original>
